<compile_context>
chip_gen: v7x
topology: tpu7x:2x2x1
jax: 0.10.0
libtpu: 0.0.40
codegen_flags: <defaults>
</compile_context>

<pallas_src>
import functools

import jax
import jax.numpy as jnp
from jax.experimental import pallas as pl
from jax.experimental.pallas import tpu as pltpu


def _round_up(x, m):
    return ((x + m - 1) // m) * m


def _autovariate_kernel(x_ref, eps_ref,
                        w1_ref, b1_ref,     # hidden_to_input          [D,H], [1,H]
                        wmv_ref, bmv_ref,   # fused mean|variance head [H,2Z],[1,2Z]
                        wz_ref, bz_ref,     # z_to_hidden              [Z,H], [1,H]
                        wo_ref, bo_ref,     # hidden_to_output         [H,D], [1,D]
                        out_ref,            # packed [TB, D+2Z] = sigmoid(out)|mean|var
                        *, z_dim, d_dim):
    x = x_ref[...]                                                     # bf16 [TB, D]

    # ---- encode ----
    h = jnp.dot(x, w1_ref[...], preferred_element_type=jnp.float32) + b1_ref[...]
    h = jnp.maximum(h, 0.0)                                            # ReLU (f32)

    # fused mean/variance head: one matmul, slice afterwards
    mv = jnp.dot(h.astype(wmv_ref.dtype), wmv_ref[...],
                 preferred_element_type=jnp.float32) + bmv_ref[...]    # [TB, 2Z] f32
    mean = mv[:, :z_dim]
    var = mv[:, z_dim:]

    # ---- reparameterize (epsilon ~ U[0,1), supplied as f32 input) ----
    z = mean + var * eps_ref[...]                                      # f32

    # ---- decode ----
    h2 = jnp.dot(z.astype(wz_ref.dtype), wz_ref[...],
                 preferred_element_type=jnp.float32) + bz_ref[...]
    h2 = jnp.maximum(h2, 0.0)                                          # ReLU (f32)
    logits = jnp.dot(h2.astype(wo_ref.dtype), wo_ref[...],
                     preferred_element_type=jnp.float32) + bo_ref[...]

    # single lane-dense store of the packed output slab
    out_ref[...] = jnp.concatenate([jax.nn.sigmoid(logits), mv], axis=1)


def autovariate_forward(x, eps, params, *, block_b=None,
                        compute_dtype=jnp.bfloat16):
    """x: [B, D] f32; eps: [B, Z] f32; params: dict of (weight[in,out], bias[1,out])."""
    B, D = x.shape
    Z = eps.shape[1]

    (w1, b1) = params["hidden_to_input"]
    (wm, bm) = params["hidden_convert_mean"]
    (wv, bv) = params["hidden_convert_variance"]
    (wz, bz) = params["z_to_hidden"]
    (wo, bo) = params["hidden_to_output"]
    H = w1.shape[1]

    # Fuse the two encoder heads: [H, 2Z] weight, [1, 2Z] bias.
    wmv = jnp.concatenate([wm, wv], axis=1)
    bmv = jnp.concatenate([bm, bv], axis=1)

    # Batch tile: multiple of 8 (f32 sublanes); weights stay VMEM-resident
    # across grid steps so larger B just adds parallel grid steps.
    if block_b is None:
        block_b = min(_round_up(max(B, 8), 8), 512)
    B_pad = _round_up(B, block_b)
    if B_pad != B:
        x = jnp.pad(x, ((0, B_pad - B), (0, 0)))
        eps = jnp.pad(eps, ((0, B_pad - B), (0, 0)))

    # MXU-friendly operand dtypes; biases + elementwise math stay f32.
    xc = x.astype(compute_dtype)
    w1c = w1.astype(compute_dtype)
    wmvc = wmv.astype(compute_dtype)
    wzc = wz.astype(compute_dtype)
    woc = wo.astype(compute_dtype)
    epsf = eps.astype(jnp.float32)
    b1f, bmvf, bzf, bof = (b.astype(jnp.float32) for b in (b1, bmv, bz, bo))

    grid = (B_pad // block_b,)
    full = lambda shape: pl.BlockSpec(shape, lambda i: (0, 0))
    batched = lambda width: pl.BlockSpec((block_b, width), lambda i: (i, 0))

    kernel = functools.partial(_autovariate_kernel, z_dim=Z, d_dim=D)

    itemsize = lambda a: a.size * a.dtype.itemsize
    cost = pl.CostEstimate(
        flops=2 * B_pad * (D * H + H * 2 * Z + Z * H + H * D),
        transcendentals=B_pad * D,                       # sigmoid
        bytes_accessed=(itemsize(xc) + itemsize(epsf)
                        + itemsize(w1c) + itemsize(wmvc) + itemsize(wzc) + itemsize(woc)
                        + itemsize(b1f) + itemsize(bmvf) + itemsize(bzf) + itemsize(bof)
                        + B_pad * (D + 2 * Z) * 4),
    )

    packed = pl.pallas_call(
        kernel,
        out_shape=jax.ShapeDtypeStruct((B_pad, D + 2 * Z), jnp.float32),
        grid=grid,
        in_specs=[
            batched(D),                           # x
            batched(Z),                           # eps
            full((D, H)), full((1, H)),           # hidden_to_input
            full((H, 2 * Z)), full((1, 2 * Z)),   # fused mean|variance head
            full((Z, H)), full((1, H)),           # z_to_hidden
            full((H, D)), full((1, D)),           # hidden_to_output
        ],
        out_specs=batched(D + 2 * Z),
        compiler_params=pltpu.CompilerParams(
            dimension_semantics=("parallel",)),
        cost_estimate=cost,
    )(xc, epsf, w1c, b1f, wmvc, bmvf, wzc, bzf, woc, bof)

    packed = packed[:B]
    x_encoder = packed[:, :D]
    mean = packed[:, D:D + Z]
    var = packed[:, D + Z:]
    return x_encoder, mean, var


def init_params(key, dimensions, hidden_dimensions, z_dimensions):
    """Deterministic init mimicking nn.Linear (uniform +-1/sqrt(fan_in)).

    Weights are stored pre-transposed as [in_features, out_features]."""
    def linear(k, fan_in, fan_out):
        kw, kb = jax.random.split(k)
        bound = 1.0 / jnp.sqrt(fan_in)
        w = jax.random.uniform(kw, (fan_in, fan_out), jnp.float32, -bound, bound)
        b = jax.random.uniform(kb, (1, fan_out), jnp.float32, -bound, bound)
        return w, b

    k1, k2, k3, k4, k5 = jax.random.split(key, 5)
    return {
        "hidden_to_input":         linear(k1, dimensions,        hidden_dimensions),
        "hidden_convert_mean":     linear(k2, hidden_dimensions, z_dimensions),
        "hidden_convert_variance": linear(k3, hidden_dimensions, z_dimensions),
        "z_to_hidden":             linear(k4, z_dimensions,      hidden_dimensions),
        "hidden_to_output":        linear(k5, hidden_dimensions, dimensions),
    }


def reference_forward(x, eps, params, compute_dtype=jnp.bfloat16):
    """Pure-JAX reference using the same bf16-operand / f32-accumulate recipe."""
    cd = compute_dtype
    (w1, b1) = params["hidden_to_input"]
    (wm, bm) = params["hidden_convert_mean"]
    (wv, bv) = params["hidden_convert_variance"]
    (wz, bz) = params["z_to_hidden"]
    (wo, bo) = params["hidden_to_output"]

    def mm(a, w):
        return jnp.dot(a.astype(cd), w.astype(cd),
                       preferred_element_type=jnp.float32)

    h = jax.nn.relu(mm(x, w1) + b1)
    mean = mm(h, wm) + bm
    var = mm(h, wv) + bv
    z = mean + var * eps
    h2 = jax.nn.relu(mm(z, wz) + bz)
    out = jax.nn.sigmoid(mm(h2, wo) + bo)
    return out, mean, var


if __name__ == "__main__":
    # small shapes consistent with the module: batch=8, dimensions=32,
    # hidden_dimensions=64, z_dimensions=16
    B, D, H, Z = 8, 32, 64, 16

    key = jax.random.PRNGKey(0)
    k_params, k_x, k_eps = jax.random.split(key, 3)

    params = init_params(k_params, D, H, Z)
    x = jax.random.normal(k_x, (B, D), jnp.float32)
    eps = jax.random.uniform(k_eps, (B, Z), jnp.float32)   # torch.rand_like -> U[0,1)

    x_encoder, mean, var = autovariate_forward(x, eps, params)
    jax.block_until_ready((x_encoder, mean, var))

    # sanity check against a pure-JAX reference with the same precision recipe
    ref_out, ref_mean, ref_var = reference_forward(x, eps, params)
    assert jnp.allclose(x_encoder, ref_out, atol=1e-3, rtol=1e-3), "output mismatch"
    assert jnp.allclose(mean, ref_mean, atol=1e-3, rtol=1e-3), "mean mismatch"
    assert jnp.allclose(var, ref_var, atol=1e-3, rtol=1e-3), "variance mismatch"

    print("KERNEL_OK")
</pallas_src>

<mosaic_0001>
module attributes {stable_mosaic.version = 11 : i64} {
  func.func @_autovariate_kernel(%arg0: i32, %arg1: memref<8x32xbf16, #tpu.memory_space<vmem>>, %arg2: memref<8x16xf32, #tpu.memory_space<vmem>>, %arg3: memref<32x64xbf16, #tpu.memory_space<vmem>>, %arg4: memref<1x64xf32, #tpu.memory_space<vmem>>, %arg5: memref<64x32xbf16, #tpu.memory_space<vmem>>, %arg6: memref<1x32xf32, #tpu.memory_space<vmem>>, %arg7: memref<16x64xbf16, #tpu.memory_space<vmem>>, %arg8: memref<1x64xf32, #tpu.memory_space<vmem>>, %arg9: memref<64x32xbf16, #tpu.memory_space<vmem>>, %arg10: memref<1x32xf32, #tpu.memory_space<vmem>>, %arg11: memref<8x64xf32, #tpu.memory_space<vmem>>) attributes {dimension_semantics = [#tpu.dimension_semantics<parallel>], iteration_bounds = array<i64: 1>, scalar_prefetch = 0 : i64, scratch_operands = 0 : i64, tpu.core_type = #tpu.core_type<tc>, window_params = [{transform_indices = @transform_0, window_bounds = array<i64: 8, 32>}, {transform_indices = @transform_1, window_bounds = array<i64: 8, 16>}, {pipeline_mode = #tpu.pipeline_mode<synchronous>, transform_indices = @transform_2, window_bounds = array<i64: 32, 64>}, {pipeline_mode = #tpu.pipeline_mode<synchronous>, transform_indices = @transform_3, window_bounds = array<i64: 1, 64>}, {pipeline_mode = #tpu.pipeline_mode<synchronous>, transform_indices = @transform_4, window_bounds = array<i64: 64, 32>}, {pipeline_mode = #tpu.pipeline_mode<synchronous>, transform_indices = @transform_5, window_bounds = array<i64: 1, 32>}, {pipeline_mode = #tpu.pipeline_mode<synchronous>, transform_indices = @transform_6, window_bounds = array<i64: 16, 64>}, {pipeline_mode = #tpu.pipeline_mode<synchronous>, transform_indices = @transform_7, window_bounds = array<i64: 1, 64>}, {pipeline_mode = #tpu.pipeline_mode<synchronous>, transform_indices = @transform_8, window_bounds = array<i64: 64, 32>}, {pipeline_mode = #tpu.pipeline_mode<synchronous>, transform_indices = @transform_9, window_bounds = array<i64: 1, 32>}, {transform_indices = @transform_10, window_bounds = array<i64: 8, 64>}]} {
    %c0 = arith.constant 0 : index
    %c0_0 = arith.constant 0 : index
    %0 = vector.load %arg1[%c0, %c0_0] : memref<8x32xbf16, #tpu.memory_space<vmem>>, vector<8x32xbf16>
    %c0_1 = arith.constant 0 : index
    %c0_2 = arith.constant 0 : index
    %1 = vector.load %arg3[%c0_1, %c0_2] : memref<32x64xbf16, #tpu.memory_space<vmem>>, vector<32x64xbf16>
    %cst = arith.constant dense<0.000000e+00> : vector<8x64xf32>
    %2 = tpu.matmul %0, %1, %cst {dimension_numbers = #tpu.dot_dimension_numbers<[1], [0], [0], [1], [0, 0, 1, 1], [], []>} : vector<8x32xbf16>, vector<32x64xbf16>, vector<8x64xf32> -> vector<8x64xf32>
    %c0_3 = arith.constant 0 : index
    %c0_4 = arith.constant 0 : index
    %3 = vector.load %arg4[%c0_3, %c0_4] : memref<1x64xf32, #tpu.memory_space<vmem>>, vector<1x64xf32>
    %4 = vector.broadcast %3 : vector<1x64xf32> to vector<8x64xf32>
    %5 = arith.addf %2, %4 : vector<8x64xf32>
    %cst_5 = arith.constant 0.000000e+00 : f32
    %6 = vector.broadcast %cst_5 : f32 to vector<8x64xf32>
    %7 = arith.maximumf %5, %6 : vector<8x64xf32>
    %8 = arith.truncf %7 : vector<8x64xf32> to vector<8x64xbf16>
    %c0_6 = arith.constant 0 : index
    %c0_7 = arith.constant 0 : index
    %9 = vector.load %arg5[%c0_6, %c0_7] : memref<64x32xbf16, #tpu.memory_space<vmem>>, vector<64x32xbf16>
    %cst_8 = arith.constant dense<0.000000e+00> : vector<8x32xf32>
    %10 = tpu.matmul %8, %9, %cst_8 {dimension_numbers = #tpu.dot_dimension_numbers<[1], [0], [0], [1], [0, 0, 1, 1], [], []>} : vector<8x64xbf16>, vector<64x32xbf16>, vector<8x32xf32> -> vector<8x32xf32>
    %c0_9 = arith.constant 0 : index
    %c0_10 = arith.constant 0 : index
    %11 = vector.load %arg6[%c0_9, %c0_10] : memref<1x32xf32, #tpu.memory_space<vmem>>, vector<1x32xf32>
    %12 = vector.broadcast %11 : vector<1x32xf32> to vector<8x32xf32>
    %13 = arith.addf %10, %12 : vector<8x32xf32>
    %14 = vector.extract_strided_slice %13 {offsets = [0, 0], sizes = [8, 16], strides = [1, 1]} : vector<8x32xf32> to vector<8x16xf32>
    %15 = vector.extract_strided_slice %13 {offsets = [0, 16], sizes = [8, 16], strides = [1, 1]} : vector<8x32xf32> to vector<8x16xf32>
    %c0_11 = arith.constant 0 : index
    %c0_12 = arith.constant 0 : index
    %16 = vector.load %arg2[%c0_11, %c0_12] : memref<8x16xf32, #tpu.memory_space<vmem>>, vector<8x16xf32>
    %17 = arith.mulf %15, %16 : vector<8x16xf32>
    %18 = arith.addf %14, %17 : vector<8x16xf32>
    %19 = arith.truncf %18 : vector<8x16xf32> to vector<8x16xbf16>
    %c0_13 = arith.constant 0 : index
    %c0_14 = arith.constant 0 : index
    %20 = vector.load %arg7[%c0_13, %c0_14] : memref<16x64xbf16, #tpu.memory_space<vmem>>, vector<16x64xbf16>
    %cst_15 = arith.constant dense<0.000000e+00> : vector<8x64xf32>
    %21 = tpu.matmul %19, %20, %cst_15 {dimension_numbers = #tpu.dot_dimension_numbers<[1], [0], [0], [1], [0, 0, 1, 1], [], []>} : vector<8x16xbf16>, vector<16x64xbf16>, vector<8x64xf32> -> vector<8x64xf32>
    %c0_16 = arith.constant 0 : index
    %c0_17 = arith.constant 0 : index
    %22 = vector.load %arg8[%c0_16, %c0_17] : memref<1x64xf32, #tpu.memory_space<vmem>>, vector<1x64xf32>
    %23 = vector.broadcast %22 : vector<1x64xf32> to vector<8x64xf32>
    %24 = arith.addf %21, %23 : vector<8x64xf32>
    %cst_18 = arith.constant 0.000000e+00 : f32
    %25 = vector.broadcast %cst_18 : f32 to vector<8x64xf32>
    %26 = arith.maximumf %24, %25 : vector<8x64xf32>
    %27 = arith.truncf %26 : vector<8x64xf32> to vector<8x64xbf16>
    %c0_19 = arith.constant 0 : index
    %c0_20 = arith.constant 0 : index
    %28 = vector.load %arg9[%c0_19, %c0_20] : memref<64x32xbf16, #tpu.memory_space<vmem>>, vector<64x32xbf16>
    %cst_21 = arith.constant dense<0.000000e+00> : vector<8x32xf32>
    %29 = tpu.matmul %27, %28, %cst_21 {dimension_numbers = #tpu.dot_dimension_numbers<[1], [0], [0], [1], [0, 0, 1, 1], [], []>} : vector<8x64xbf16>, vector<64x32xbf16>, vector<8x32xf32> -> vector<8x32xf32>
    %c0_22 = arith.constant 0 : index
    %c0_23 = arith.constant 0 : index
    %30 = vector.load %arg10[%c0_22, %c0_23] : memref<1x32xf32, #tpu.memory_space<vmem>>, vector<1x32xf32>
    %31 = vector.broadcast %30 : vector<1x32xf32> to vector<8x32xf32>
    %32 = arith.addf %29, %31 : vector<8x32xf32>
    %33 = arith.negf %32 : vector<8x32xf32>
    %34 = math.exp %33 : vector<8x32xf32>
    %cst_24 = arith.constant 1.000000e+00 : f32
    %35 = vector.broadcast %cst_24 : f32 to vector<8x32xf32>
    %36 = arith.addf %35, %34 : vector<8x32xf32>
    %37 = arith.divf %35, %36 : vector<8x32xf32>
    %38 = tpu.concatenate %37, %13 in 1 : vector<8x32xf32>, vector<8x32xf32> -> vector<8x64xf32>
    %c0_25 = arith.constant 0 : index
    %c0_26 = arith.constant 0 : index
    %39 = vector.load %arg11[%c0_25, %c0_26] : memref<8x64xf32, #tpu.memory_space<vmem>>, vector<8x64xf32>
    tpu.vector_store %arg11[%c0_25, %c0_26], %38 {strides = array<i32>} : memref<8x64xf32, #tpu.memory_space<vmem>>, vector<8x64xf32>,
    return
  }
  func.func @transform_0(%arg0: i32) -> (i32, i32) {
    %c0_i32 = arith.constant 0 : i32
    %c0_i32_0 = arith.constant 0 : i32
    return %arg0, %c0_i32 : i32, i32
  }
  func.func @transform_1(%arg0: i32) -> (i32, i32) {
    %c0_i32 = arith.constant 0 : i32
    %c0_i32_0 = arith.constant 0 : i32
    return %arg0, %c0_i32 : i32, i32
  }
  func.func @transform_2(%arg0: i32) -> (i32, i32) {
    %c0_i32 = arith.constant 0 : i32
    %c0_i32_0 = arith.constant 0 : i32
    %c0_i32_1 = arith.constant 0 : i32
    return %c0_i32, %c0_i32_0 : i32, i32
  }
  func.func @transform_3(%arg0: i32) -> (i32, i32) {
    %c0_i32 = arith.constant 0 : i32
    %c0_i32_0 = arith.constant 0 : i32
    %c0_i32_1 = arith.constant 0 : i32
    return %c0_i32, %c0_i32_0 : i32, i32
  }
  func.func @transform_4(%arg0: i32) -> (i32, i32) {
    %c0_i32 = arith.constant 0 : i32
    %c0_i32_0 = arith.constant 0 : i32
    %c0_i32_1 = arith.constant 0 : i32
    return %c0_i32, %c0_i32_0 : i32, i32
  }
  func.func @transform_5(%arg0: i32) -> (i32, i32) {
    %c0_i32 = arith.constant 0 : i32
    %c0_i32_0 = arith.constant 0 : i32
    %c0_i32_1 = arith.constant 0 : i32
    return %c0_i32, %c0_i32_0 : i32, i32
  }
  func.func @transform_6(%arg0: i32) -> (i32, i32) {
    %c0_i32 = arith.constant 0 : i32
    %c0_i32_0 = arith.constant 0 : i32
    %c0_i32_1 = arith.constant 0 : i32
    return %c0_i32, %c0_i32_0 : i32, i32
  }
  func.func @transform_7(%arg0: i32) -> (i32, i32) {
    %c0_i32 = arith.constant 0 : i32
    %c0_i32_0 = arith.constant 0 : i32
    %c0_i32_1 = arith.constant 0 : i32
    return %c0_i32, %c0_i32_0 : i32, i32
  }
  func.func @transform_8(%arg0: i32) -> (i32, i32) {
    %c0_i32 = arith.constant 0 : i32
    %c0_i32_0 = arith.constant 0 : i32
    %c0_i32_1 = arith.constant 0 : i32
    return %c0_i32, %c0_i32_0 : i32, i32
  }
  func.func @transform_9(%arg0: i32) -> (i32, i32) {
    %c0_i32 = arith.constant 0 : i32
    %c0_i32_0 = arith.constant 0 : i32
    %c0_i32_1 = arith.constant 0 : i32
    return %c0_i32, %c0_i32_0 : i32, i32
  }
  func.func @transform_10(%arg0: i32) -> (i32, i32) {
    %c0_i32 = arith.constant 0 : i32
    %c0_i32_0 = arith.constant 0 : i32
    return %arg0, %c0_i32 : i32, i32
  }
}

</mosaic_0001>

<llo_original>
// kernel: tpu_custom_call.1
$region0: #{tpu_custom_call.1}
  #allocation0 [shape = 'u32[]', space=smem, size = 0x4, offset = 0x4, fixed_abs, tag = 'smem constant byte address 0x4 - core index']
  #allocation1 [shape = 'u32[144,128]{1,0:T(1,128)}', space=vmem, size = 0x12000, scoped, tag = 'internal scratch']
  %s0 = inlined_call_operand.vmem [shape: bf16[8,32], index: 0, kind: input, shape index: {}]
  %s1 = inlined_call_operand.vmem [shape: f32[8,16], index: 1, kind: input, shape index: {}]
  %s2 = inlined_call_operand.vmem [shape: bf16[32,64], index: 2, kind: input, shape index: {}]
  %s3 = inlined_call_operand.vmem [shape: f32[1,64], index: 3, kind: input, shape index: {}]
  %s4 = inlined_call_operand.vmem [shape: bf16[64,32], index: 4, kind: input, shape index: {}]
  %s5 = inlined_call_operand.vmem [shape: f32[1,32], index: 5, kind: input, shape index: {}]
  %s6 = inlined_call_operand.vmem [shape: bf16[16,64], index: 6, kind: input, shape index: {}]
  %s7 = inlined_call_operand.vmem [shape: f32[1,64], index: 7, kind: input, shape index: {}]
  %s8 = inlined_call_operand.vmem [shape: bf16[64,32], index: 8, kind: input, shape index: {}]
  %s9 = inlined_call_operand.vmem [shape: f32[1,32], index: 9, kind: input, shape index: {}]
  %s10 = inlined_call_operand.hbm [shape: f32[8,64], index: 10, kind: output, shape index: {}]
  %s11 = sld [smem:[#allocation0]]
  $region50: #{tpu_custom_call.1} parent=0
    _
  %s13 = ssub.s32 1, %s11
  %s14 = scalar_select 0, %s13, %s11
  $region1: #{tpu_custom_call.1} parent=0
    #allocation2 [shape = 'u8[4096]{0}', space=vmem, size = 0x1000, scoped, tag = 'output window, operand 0, single buffered']
    #allocation3 [shape = 's32[1]{0}', space=sflag, size = 0x4, scoped, tag = 'scoped memory for tpu_custom_call.1']
    %15 = vsyncpa [#allocation3], 0
    // Predicated region
    $region2: #{tpu_custom_call.1} parent=1 // pred_check
      _
    $region3: #{tpu_custom_call.1} parent=1 // pred_check_branch
      %17 = sbr.rel (0) target = $region5
    $region4: #{tpu_custom_call.1} parent=1 // pred_region
      _
    $region5: #{tpu_custom_call.1} parent=1 // pred_fallthru
      _
    // Predicated region
    $region6: #{tpu_custom_call.1} parent=1 // pred_check
      _
    $region7: #{tpu_custom_call.1} parent=1 // pred_check_branch
      %19 = sbr.rel (0) target = $region9
    $region8: #{tpu_custom_call.1} parent=1 // pred_region
      _
    $region9: #{tpu_custom_call.1} parent=1 // pred_fallthru
      _
    // Predicated region
    $region10: #{tpu_custom_call.1} parent=1 // pred_check
      _
    $region11: #{tpu_custom_call.1} parent=1 // pred_check_branch
      %21 = sbr.rel (0) target = $region13
    $region12: #{tpu_custom_call.1} parent=1 // pred_region
      _
    $region13: #{tpu_custom_call.1} parent=1 // pred_fallthru
      _
    // Predicated region
    $region14: #{tpu_custom_call.1} parent=1 // pred_check
      _
    $region15: #{tpu_custom_call.1} parent=1 // pred_check_branch
      %23 = sbr.rel (0) target = $region17
    $region16: #{tpu_custom_call.1} parent=1 // pred_region
      _
    $region17: #{tpu_custom_call.1} parent=1 // pred_fallthru
      _
    // Predicated region
    $region18: #{tpu_custom_call.1} parent=1 // pred_check
      _
    $region19: #{tpu_custom_call.1} parent=1 // pred_check_branch
      %25 = sbr.rel (0) target = $region21
    $region20: #{tpu_custom_call.1} parent=1 // pred_region
      _
    $region21: #{tpu_custom_call.1} parent=1 // pred_fallthru
      _
    // Predicated region
    $region22: #{tpu_custom_call.1} parent=1 // pred_check
      _
    $region23: #{tpu_custom_call.1} parent=1 // pred_check_branch
      %27 = sbr.rel (0) target = $region25
    $region24: #{tpu_custom_call.1} parent=1 // pred_region
      _
    $region25: #{tpu_custom_call.1} parent=1 // pred_fallthru
      _
    // Predicated region
    $region26: #{tpu_custom_call.1} parent=1 // pred_check
      _
    $region27: #{tpu_custom_call.1} parent=1 // pred_check_branch
      %29 = sbr.rel (0) target = $region29
    $region28: #{tpu_custom_call.1} parent=1 // pred_region
      _
    $region29: #{tpu_custom_call.1} parent=1 // pred_fallthru
      _
    // Predicated region
    $region30: #{tpu_custom_call.1} parent=1 // pred_check
      _
    $region31: #{tpu_custom_call.1} parent=1 // pred_check_branch
      %31 = sbr.rel (0) target = $region33
    $region32: #{tpu_custom_call.1} parent=1 // pred_region
      _
    $region33: #{tpu_custom_call.1} parent=1 // pred_fallthru
      _
    // Predicated region
    $region34: #{tpu_custom_call.1} parent=1 // pred_check
      _
    $region35: #{tpu_custom_call.1} parent=1 // pred_check_branch
      %33 = sbr.rel (0) target = $region37
    $region36: #{tpu_custom_call.1} parent=1 // pred_region
      _
    $region37: #{tpu_custom_call.1} parent=1 // pred_fallthru
      _
    // Predicated region
    $region38: #{tpu_custom_call.1} parent=1 // pred_check
      _
    $region39: #{tpu_custom_call.1} parent=1 // pred_check_branch
      %35 = sbr.rel (0) target = $region41
    $region40: #{tpu_custom_call.1} parent=1 // pred_region
      _
    $region41: #{tpu_custom_call.1} parent=1 // pred_fallthru
      _
    %v37 = vld [vmem:[%s0] sm:$0xf]
    %v38 = vld [vmem:[%s2] sm:$0xf]
    %v39 = vld [vmem:[%s2 + $0x4] sm:$0xf]
    %v40 = vld [vmem:[%s2 + $0x8] sm:$0xf]
    %v41 = vld [vmem:[%s2 + $0xc] sm:$0xf]
    %v42 = vld [vmem:[%s3] sm:$0x1]
    %v44 = vlaneseq
    %v45 = vshrl.u32 %v44, 7
    %v46 = vsub.s32 0, %v45
    %v47 = vrot.slane %v42, %v46
    %v53 = vunpack.c.l.b16 %v38
    %v54 = vunpack.c.l.b16 %v39
    %v55 = vunpack.c.l.b16 %v40
    %v56 = vunpack.c.l.b16 %v41
    %v57 = vpack.c.b16 %v54, %v53
    %v58 = vpack.c.b16 %v56, %v55
    %vm61 = vcmask 261120
    %v63 = vsel %vm61, %v37, 0
    %65 = vmatprep.subr.bf16.mxu0 0
    %66 = vmatpush1.bf16.msra.mxu0 %v57
    %67 = vmatprep.subr.bf16.mxu0 0
    %68 = vmatpush1.bf16.msra.mxu0 %v58
    %69 = vmatprep.subr.bf16.mxu0 0
    %70 = vmatpush1.bf16.msra.mxu0 0
    %71 = vmatprep.subr.bf16.mxu0 0
    %72 = vmatpush1.bf16.msra.mxu0 0
    %73 = vmatprep.subr.bf16.mxu0 0
    %74 = vmatpush1.bf16.msra.mxu0 0
    %75 = vmatprep.subr.bf16.mxu0 0
    %76 = vmatpush1.bf16.msra.mxu0 0
    %77 = vmatprep.subr.bf16.mxu0 0
    %78 = vmatpush1.bf16.msra.mxu0 0
    %79 = vmatprep.subr.bf16.mxu0 0
    %80 = vmatpush1.bf16.msra.mxu0 0
    %81 = vmatprep.subr.bf16.mxu0 0
    %82 = vmatpush1.bf16.msra.mxu0 0
    %83 = vmatprep.subr.bf16.mxu0 0
    %84 = vmatpush1.bf16.msra.mxu0 0
    %85 = vmatprep.subr.bf16.mxu0 0
    %86 = vmatpush1.bf16.msra.mxu0 0
    %87 = vmatprep.subr.bf16.mxu0 0
    %88 = vmatpush1.bf16.msra.mxu0 0
    %89 = vmatprep.subr.bf16.mxu0 0
    %90 = vmatpush1.bf16.msra.mxu0 0
    %91 = vmatprep.subr.bf16.mxu0 0
    %92 = vmatpush1.bf16.msra.mxu0 0
    %93 = vmatprep.subr.bf16.mxu0 0
    %94 = vmatpush1.bf16.msra.mxu0 0
    %95 = vmatprep.subr.bf16.mxu0 0
    %96 = vmatpush1.bf16.msra.mxu0 0
    %97 = vmatprep.mubr.bf16.mxu0 0
    %98 = vmatmul.mubr.bf16.gmra.mrb[0].mxu0 %v63
    %v99 = vpop.f32.mrb[0].mxu0
    %v100 = vadd.f32 %v47, %v99
    %v101 = vpop.f32.mrb[0].mxu0
    %v102 = vpop.f32.mrb[0].mxu0
    %v103 = vpop.f32.mrb[0].mxu0
    %104 = vdwg.mxu0
    %v105 = vmax.f32 %v100, 0.0
    %v106 = vpack.c.bf16 %v105, %v105
    %v107 = vld [vmem:[%s4] sm:$0xf]
    %v108 = vld [vmem:[%s4 + $0x4] sm:$0xf]
    %v109 = vld [vmem:[%s4 + $0x8] sm:$0xf]
    %v110 = vld [vmem:[%s4 + $0xc] sm:$0xf]
    %v111 = vld [vmem:[%s4 + $0x10] sm:$0xf]
    %v112 = vld [vmem:[%s4 + $0x14] sm:$0xf]
    %v113 = vld [vmem:[%s4 + $0x18] sm:$0xf]
    %v114 = vld [vmem:[%s4 + $0x1c] sm:$0xf]
    %v115 = vld [vmem:[%s5] sm:$0x1]
    %v117 = vlaneseq
    %v118 = vshrl.u32 %v117, 7
    %v119 = vsub.s32 0, %v118
    %v120 = vrot.slane %v115, %v119
    %v130 = vunpack.c.l.b16 %v107
    %v131 = vunpack.c.l.b16 %v108
    %v132 = vunpack.c.l.b16 %v109
    %v133 = vunpack.c.l.b16 %v110
    %v134 = vunpack.c.l.b16 %v111
    %v135 = vunpack.c.l.b16 %v112
    %v136 = vunpack.c.l.b16 %v113
    %v137 = vunpack.c.l.b16 %v114
    %v138 = vpack.c.b16 %v131, %v130
    %v139 = vpack.c.b16 %v133, %v132
    %v140 = vpack.c.b16 %v135, %v134
    %v141 = vpack.c.b16 %v137, %v136
    %vm146 = vcmask 523264
    %v148 = vsel %vm146, %v106, 0
    %150 = vmatprep.subr.bf16.mxu0 0
    %151 = vmatpush1.bf16.msra.mxu0 %v138
    %152 = vmatprep.subr.bf16.mxu0 0
    %153 = vmatpush1.bf16.msra.mxu0 %v139
    %154 = vmatprep.subr.bf16.mxu0 0
    %155 = vmatpush1.bf16.msra.mxu0 %v140
    %156 = vmatprep.subr.bf16.mxu0 0
    %157 = vmatpush1.bf16.msra.mxu0 %v141
    %158 = vmatprep.subr.bf16.mxu0 0
    %159 = vmatpush1.bf16.msra.mxu0 0
    %160 = vmatprep.subr.bf16.mxu0 0
    %161 = vmatpush1.bf16.msra.mxu0 0
    %162 = vmatprep.subr.bf16.mxu0 0
    %163 = vmatpush1.bf16.msra.mxu0 0
    %164 = vmatprep.subr.bf16.mxu0 0
    %165 = vmatpush1.bf16.msra.mxu0 0
    %166 = vmatprep.subr.bf16.mxu0 0
    %167 = vmatpush1.bf16.msra.mxu0 0
    %168 = vmatprep.subr.bf16.mxu0 0
    %169 = vmatpush1.bf16.msra.mxu0 0
    %170 = vmatprep.subr.bf16.mxu0 0
    %171 = vmatpush1.bf16.msra.mxu0 0
    %172 = vmatprep.subr.bf16.mxu0 0
    %173 = vmatpush1.bf16.msra.mxu0 0
    %174 = vmatprep.subr.bf16.mxu0 0
    %175 = vmatpush1.bf16.msra.mxu0 0
    %176 = vmatprep.subr.bf16.mxu0 0
    %177 = vmatpush1.bf16.msra.mxu0 0
    %178 = vmatprep.subr.bf16.mxu0 0
    %179 = vmatpush1.bf16.msra.mxu0 0
    %180 = vmatprep.subr.bf16.mxu0 0
    %181 = vmatpush1.bf16.msra.mxu0 0
    %182 = vmatprep.mubr.bf16.mxu0 0
    %183 = vmatmul.mubr.bf16.gmra.mrb[0].mxu0 %v148
    %v184 = vpop.f32.mrb[0].mxu0
    %v185 = vadd.f32 %v120, %v184
    %v186 = vpop.f32.mrb[0].mxu0
    %v187 = vpop.f32.mrb[0].mxu0
    %v188 = vpop.f32.mrb[0].mxu0
    %189 = vdwg.mxu0
    %v190 = vld [vmem:[%s1] sm:$0xff]
    %192 = vrot.lane.b32.xlu0 %v190, 16
    %v193 = vpop.permute.xlu0 %192
    %v195 = vmul.f32 %v185, %v193
    %197 = vrot.lane.b32.xlu0 %v195, 112
    %v198 = vpop.permute.xlu0 %197
    %v200 = vadd.f32 %v185, %v198
    %v201 = vpack.c.bf16 %v200, %v200
    %v202 = vld [vmem:[%s6] sm:$0xf]
    %v203 = vld [vmem:[%s6 + $0x4] sm:$0xf]
    %v204 = vld [vmem:[%s7] sm:$0x1]
    %v206 = vlaneseq
    %v207 = vshrl.u32 %v206, 7
    %v208 = vsub.s32 0, %v207
    %v209 = vrot.slane %v204, %v208
    %v213 = vunpack.c.l.b16 %v202
    %v214 = vunpack.c.l.b16 %v203
    %v215 = vpack.c.b16 %v214, %v213
    %vm217 = vcmask 130048
    %v219 = vsel %vm217, %v201, 0
    %221 = vmatprep.subr.bf16.mxu0 0
    %222 = vmatpush1.bf16.msra.mxu0 %v215
    %223 = vmatprep.subr.bf16.mxu0 0
    %224 = vmatpush1.bf16.msra.mxu0 0
    %225 = vmatprep.subr.bf16.mxu0 0
    %226 = vmatpush1.bf16.msra.mxu0 0
    %227 = vmatprep.subr.bf16.mxu0 0
    %228 = vmatpush1.bf16.msra.mxu0 0
    %229 = vmatprep.subr.bf16.mxu0 0
    %230 = vmatpush1.bf16.msra.mxu0 0
    %231 = vmatprep.subr.bf16.mxu0 0
    %232 = vmatpush1.bf16.msra.mxu0 0
    %233 = vmatprep.subr.bf16.mxu0 0
    %234 = vmatpush1.bf16.msra.mxu0 0
    %235 = vmatprep.subr.bf16.mxu0 0
    %236 = vmatpush1.bf16.msra.mxu0 0
    %237 = vmatprep.subr.bf16.mxu0 0
    %238 = vmatpush1.bf16.msra.mxu0 0
    %239 = vmatprep.subr.bf16.mxu0 0
    %240 = vmatpush1.bf16.msra.mxu0 0
    %241 = vmatprep.subr.bf16.mxu0 0
    %242 = vmatpush1.bf16.msra.mxu0 0
    %243 = vmatprep.subr.bf16.mxu0 0
    %244 = vmatpush1.bf16.msra.mxu0 0
    %245 = vmatprep.subr.bf16.mxu0 0
    %246 = vmatpush1.bf16.msra.mxu0 0
    %247 = vmatprep.subr.bf16.mxu0 0
    %248 = vmatpush1.bf16.msra.mxu0 0
    %249 = vmatprep.subr.bf16.mxu0 0
    %250 = vmatpush1.bf16.msra.mxu0 0
    %251 = vmatprep.subr.bf16.mxu0 0
    %252 = vmatpush1.bf16.msra.mxu0 0
    %253 = vmatprep.mubr.bf16.mxu0 0
    %254 = vmatmul.mubr.bf16.gmra.mrb[0].mxu0 %v219
    %v255 = vpop.f32.mrb[0].mxu0
    %v256 = vadd.f32 %v209, %v255
    %v257 = vpop.f32.mrb[0].mxu0
    %v258 = vpop.f32.mrb[0].mxu0
    %v259 = vpop.f32.mrb[0].mxu0
    %260 = vdwg.mxu0
    %v261 = vmax.f32 %v256, 0.0
    %v262 = vpack.c.bf16 %v261, %v261
    %v263 = vld [vmem:[%s8] sm:$0xf]
    %v264 = vld [vmem:[%s8 + $0x4] sm:$0xf]
    %v265 = vld [vmem:[%s8 + $0x8] sm:$0xf]
    %v266 = vld [vmem:[%s8 + $0xc] sm:$0xf]
    %v267 = vld [vmem:[%s8 + $0x10] sm:$0xf]
    %v268 = vld [vmem:[%s8 + $0x14] sm:$0xf]
    %v269 = vld [vmem:[%s8 + $0x18] sm:$0xf]
    %v270 = vld [vmem:[%s8 + $0x1c] sm:$0xf]
    %v271 = vld [vmem:[%s9] sm:$0x1]
    %v273 = vlaneseq
    %v274 = vshrl.u32 %v273, 7
    %v275 = vsub.s32 0, %v274
    %v276 = vrot.slane %v271, %v275
    %v286 = vunpack.c.l.b16 %v263
    %v287 = vunpack.c.l.b16 %v264
    %v288 = vunpack.c.l.b16 %v265
    %v289 = vunpack.c.l.b16 %v266
    %v290 = vunpack.c.l.b16 %v267
    %v291 = vunpack.c.l.b16 %v268
    %v292 = vunpack.c.l.b16 %v269
    %v293 = vunpack.c.l.b16 %v270
    %v294 = vpack.c.b16 %v287, %v286
    %v295 = vpack.c.b16 %v289, %v288
    %v296 = vpack.c.b16 %v291, %v290
    %v297 = vpack.c.b16 %v293, %v292
    %v303 = vsel %vm146, %v262, 0
    %305 = vmatprep.subr.bf16.mxu0 0
    %306 = vmatpush1.bf16.msra.mxu0 %v294
    %307 = vmatprep.subr.bf16.mxu0 0
    %308 = vmatpush1.bf16.msra.mxu0 %v295
    %309 = vmatprep.subr.bf16.mxu0 0
    %310 = vmatpush1.bf16.msra.mxu0 %v296
    %311 = vmatprep.subr.bf16.mxu0 0
    %312 = vmatpush1.bf16.msra.mxu0 %v297
    %313 = vmatprep.subr.bf16.mxu0 0
    %314 = vmatpush1.bf16.msra.mxu0 0
    %315 = vmatprep.subr.bf16.mxu0 0
    %316 = vmatpush1.bf16.msra.mxu0 0
    %317 = vmatprep.subr.bf16.mxu0 0
    %318 = vmatpush1.bf16.msra.mxu0 0
    %319 = vmatprep.subr.bf16.mxu0 0
    %320 = vmatpush1.bf16.msra.mxu0 0
    %321 = vmatprep.subr.bf16.mxu0 0
    %322 = vmatpush1.bf16.msra.mxu0 0
    %323 = vmatprep.subr.bf16.mxu0 0
    %324 = vmatpush1.bf16.msra.mxu0 0
    %325 = vmatprep.subr.bf16.mxu0 0
    %326 = vmatpush1.bf16.msra.mxu0 0
    %327 = vmatprep.subr.bf16.mxu0 0
    %328 = vmatpush1.bf16.msra.mxu0 0
    %329 = vmatprep.subr.bf16.mxu0 0
    %330 = vmatpush1.bf16.msra.mxu0 0
    %331 = vmatprep.subr.bf16.mxu0 0
    %332 = vmatpush1.bf16.msra.mxu0 0
    %333 = vmatprep.subr.bf16.mxu0 0
    %334 = vmatpush1.bf16.msra.mxu0 0
    %335 = vmatprep.subr.bf16.mxu0 0
    %336 = vmatpush1.bf16.msra.mxu0 0
    %337 = vmatprep.mubr.bf16.mxu0 0
    %338 = vmatmul.mubr.bf16.gmra.mrb[0].mxu0 %v303
    %v339 = vpop.f32.mrb[0].mxu0
    %v340 = vadd.f32 %v276, %v339
    %v341 = vpop.f32.mrb[0].mxu0
    %v342 = vpop.f32.mrb[0].mxu0
    %v343 = vpop.f32.mrb[0].mxu0
    %344 = vdwg.mxu0
    %v345 = vxor.u32 %v340, 2147483648
    %v346 = vmul.f32 %v345, 1.442695
    %v347 = vpow.pop %v346
    %v348 = vadd.f32 %v347, 1.0
    %v349 = vrcp.pop %v348
    %v350 = vmul.f32 1.0, %v349
    %352 = vrot.lane.b32.xlu0 %v185, 32
    %v353 = vpop.permute.xlu0 %352
    %v355 = vsel %vm61, %v350, %v353
    %356 = vst.msk [vmem:[#allocation2] sm:$0xff] %vm146, %v355
    // Predicated region
    $region42: #{tpu_custom_call.1} parent=1 // pred_check
      _
    $region43: #{tpu_custom_call.1} parent=1 // pred_check_branch
      %358 = sbr.rel (0) target = $region45
    $region44: #{tpu_custom_call.1} parent=1 // pred_region
      %s360 = ssub.s32 128, 128
      %361 = vsyncadd [#allocation3], %s360
      %s363 = sshll.u32 [#allocation2], 4
      %s364 = int_to_ptr.vmem [resolvable:$true] %s363
      %366 = dma.vmem_to_hbm [thread:$0]  %s364, 128, %s10, [#allocation3]
    $region45: #{tpu_custom_call.1} parent=1 // pred_fallthru
      _
    // Predicated region
    $region46: #{tpu_custom_call.1} parent=1 // pred_check
      _
    $region47: #{tpu_custom_call.1} parent=1 // pred_check_branch
      %368 = sbr.rel (0) target = $region49
    $region48: #{tpu_custom_call.1} parent=1 // pred_region
      %369 = dma.done [#allocation3], 128
    $region49: #{tpu_custom_call.1} parent=1 // pred_fallthru
      _
    %370 = vsyncpa [#allocation3], 1

</llo_original>
